<compile_context>
chip_gen: v6e
topology: v6e:2x2x1
jax: 0.10.0
libtpu: 0.0.40
codegen_flags: <defaults>
</compile_context>

<pallas_src>
import jax
import jax.numpy as jnp
from jax.experimental import pallas as pl
from jax.experimental.pallas import tpu as pltpu

# ---------------- static model config (small synthetic shapes consistent with the module) ---
INPUT_C    = 3                      # args.input_channels (must be 3: reshape(3,-1)/acc_to_abs)
OBS        = 8                      # args.obs
N_CLASSES  = 4                      # args.preds / args.preds_step
TCN_CH     = 16                     # args.tcn_channel_size
TCN_K      = 3                      # args.tcn_kernels
CTX_IN_C   = 2                      # args.num_context_input_c
NCO        = 4                      # args.num_context_output_c
CNN_K      = 2                      # args.cnn_kernels
CTX_LEN    = OBS - 2 + CNN_K        # context length so conv output length == obs-1
CTX_LOUT   = CTX_LEN - CNN_K + 1    # = obs - 1
Y_LEN      = 8                      # length of the y trajectories (output-irrelevant)
GAT_IN     = N_CLASSES * OBS + NCO  # appended encoding length (36), divisible by 3
MLP        = GAT_IN // 3            # args.mlp_layer so Linear(mlp_layer, n_classes) fits
NUM_AGENTS = 3

ACT_COLS   = INPUT_C * OBS + CTX_IN_C * CTX_LEN   # consolidated activation lanes (24 + 16)

# TemporalConvNet: num_channels = [TCN_CH]*tcn_layers + [N_CLASSES], dilation = 2**i
TCN_LAYERS = [
    (INPUT_C, TCN_CH, 1),
    (TCN_CH, TCN_CH, 2),
    (TCN_CH, N_CLASSES, 4),
]


# ---------------- packed-weight slab layout (static, agent-count independent) ---------------
def _make_layout():
    layout = {}
    off = [0]

    def add(name, h, w):
        layout[name] = (off[0], h, w)
        off[0] += -(-h // 8) * 8            # keep every block 8-sublane aligned

    bias_rows = []
    max_wide = max(cout for (_, cout, _) in TCN_LAYERS) * OBS
    for i, (cin, cout, _d) in enumerate(TCN_LAYERS):
        win, wout = cin * OBS, cout * OBS
        if cin != cout and 2 * wout <= max_wide:
            add(f"l{i}_w1d", win, 2 * wout)        # [conv1 | 1x1 downsample] share one dot
        else:
            add(f"l{i}_w1", win, wout)
            if cin != cout:
                add(f"l{i}_wd", win, wout)
        add(f"l{i}_w2", wout, wout)
        bias_rows += [f"l{i}_b1", f"l{i}_b2"] + ([f"l{i}_bd"] if cin != cout else [])
    add("act_w", ACT_COLS, NCO + 3 * N_CLASSES)    # [ctx conv+linear | decoder x[-1]/x[-2]]
    add("dec_g", GAT_IN, 3 * N_CLASSES)            # decoder linear folded with integration
    bias_rows += ["ctx_b", "dec_gb"]
    add("biases", -(-len(bias_rows) // 8) * 8, max_wide)
    width = max(w for (_, _, w) in layout.values())
    return layout, off[0], width, bias_rows


_LAYOUT, SLAB_ROWS, SLAB_W, _BIAS_ROWS = _make_layout()


# ---------------- synthetic parameter init (mirrors the module's parameter set) -------------
def init_params(key):
    ks = iter(jax.random.split(key, 128))

    def nrm(shape, std):
        return (std * jax.random.normal(next(ks), shape)).astype(jnp.float32)

    def tcn_params():
        flat = []
        for (cin, cout, _d) in TCN_LAYERS:
            flat += [nrm((TCN_K, cout, cin), 0.01),  nrm((cout, 1), 0.01),   # conv1 W, b
                     nrm((TCN_K, cout, cout), 0.01), nrm((cout, 1), 0.01)]   # conv2 W, b
            if cin != cout:
                flat += [nrm((1, cout, cin), 0.01), nrm((cout, 1), 0.01)]    # downsample W, b
        return flat

    return {
        "tcn_x": tcn_params(),
        "tcn_y": tcn_params(),                           # present in the module; unused output
        "ctx_conv_w": nrm((CNN_K, 1, CTX_IN_C), 0.1),    # (K, C_out=1, C_in)
        "ctx_conv_b": nrm((1, 1), 0.01),
        "ctx_lin_w":  nrm((CTX_LOUT, NCO), 0.05),        # pre-transposed (in, out)
        "ctx_lin_b":  nrm((1, NCO), 0.01),
        "dec_w":      nrm((MLP, N_CLASSES), 0.05),       # pre-transposed (in, out)
        "dec_b":      nrm((1, N_CLASSES), 0.01),
    }


# ---------------- host-side weight folding / packing (once, outside the hot path) -----------
def _toeplitz_causal(W, d, T):
    """Causal dilated conv (K, Cout, Cin) -> (Cin*T, Cout*T) on channel-major flattened rows."""
    K = W.shape[0]
    M = jnp.zeros((W.shape[2] * T, W.shape[1] * T), jnp.float32)
    for k in range(K):
        shift = (K - 1 - k) * d
        if shift >= T:                                   # tap reads only left padding -> drop
            continue
        S = jnp.eye(T, T, k=shift, dtype=jnp.float32)    # S[s, t] = 1  iff  t - s == shift
        M = M + jnp.kron(W[k].T, S)                      # rows ci*T+s, cols co*T+t
    return M


def pack_params(params):
    """Fold every layer into dense block matrices and pack them into ONE bf16 slab."""
    blocks, biases = {}, {}

    tcn = params["tcn_x"]            # tcn_y dropped: its output never reaches the return value
    idx = 0
    for i, (cin, cout, d) in enumerate(TCN_LAYERS):
        W1, b1, W2, b2 = tcn[idx:idx + 4]
        idx += 4
        M1 = _toeplitz_causal(W1, d, OBS)
        blocks[f"l{i}_w2"] = _toeplitz_causal(W2, d, OBS)
        biases[f"l{i}_b1"] = jnp.repeat(b1[:, 0], OBS)
        biases[f"l{i}_b2"] = jnp.repeat(b2[:, 0], OBS)
        if cin != cout:
            Wd, bd = tcn[idx:idx + 2]
            idx += 2
            Md = _toeplitz_causal(Wd, 1, OBS)            # 1x1 conv -> kron(Wd.T, I)
            biases[f"l{i}_bd"] = jnp.repeat(bd[:, 0], OBS)
            if f"l{i}_w1d" in _LAYOUT:
                blocks[f"l{i}_w1d"] = jnp.concatenate([M1, Md], axis=1)
            else:
                blocks[f"l{i}_w1"] = M1
                blocks[f"l{i}_wd"] = Md
        else:
            blocks[f"l{i}_w1"] = M1

    # context: Conv1d(valid) folded with Linear(obs-1, NCO); conv bias folded into the linear
    # bias (valid: no nonlinearity between conv and linear in the reference forward).
    Wc, Wl = params["ctx_conv_w"], params["ctx_lin_w"]
    Mc = jnp.zeros((CTX_IN_C * CTX_LEN, CTX_LOUT), jnp.float32)
    for k in range(CNN_K):
        S = jnp.eye(CTX_LEN, CTX_LOUT, k=-k, dtype=jnp.float32)   # S[s, t] = 1 iff s == t + k
        Mc = Mc + jnp.kron(Wc[k].T, S)
    ctx_w = jnp.zeros((ACT_COLS, NCO), jnp.float32).at[INPUT_C * OBS:, :].set(Mc @ Wl)
    biases["ctx_b"] = params["ctx_conv_b"][0, 0] * jnp.sum(Wl, axis=0) + params["ctx_lin_b"][0]

    # decoder + acc_to_abs (double integration, dt=1) folded into two matrices + a bias row
    n = jnp.arange(N_CLASSES, dtype=jnp.float32)
    L2 = jnp.maximum(n[None, :] - n[:, None] + 1.0, 0.0)          # acc double-cumsum (4, 4)
    eye3 = jnp.eye(3, dtype=jnp.float32)
    blocks["dec_g"] = jnp.kron(eye3, params["dec_w"] @ L2)        # (36, 12): enc/ctx features
    gx = jnp.zeros((ACT_COLS, 3 * N_CLASSES), jnp.float32)        # x[-2]/x[-1] position terms
    for c in range(3):
        gx = gx.at[c * OBS + OBS - 2, c * N_CLASSES:(c + 1) * N_CLASSES].set(-(n + 1.0))
        gx = gx.at[c * OBS + OBS - 1, c * N_CLASSES:(c + 1) * N_CLASSES].set(n + 2.0)
    blocks["act_w"] = jnp.concatenate([ctx_w, gx], axis=1)        # (ACT_COLS, NCO + 12)
    biases["dec_gb"] = jnp.tile(params["dec_b"][0] @ L2, 3)       # (12,)

    slab = jnp.zeros((SLAB_ROWS, SLAB_W), jnp.float32)
    for name, (off, h, w) in _LAYOUT.items():
        if name == "biases":
            continue
        blk = blocks[name].astype(jnp.float32)
        assert blk.shape == (h, w), (name, blk.shape, (h, w))
        slab = slab.at[off:off + h, :w].set(blk)
    boff = _LAYOUT["biases"][0]
    for j, bname in enumerate(_BIAS_ROWS):
        row = biases[bname].astype(jnp.float32)
        slab = slab.at[boff + j, :row.shape[0]].set(row)
    return slab.astype(jnp.bfloat16)                              # halve the weight DMA bytes


# ---------------- fused kernel: TCN encoder + context + decoder + acc_to_abs ----------------
def fused_kernel(act_ref, w_ref, out_ref):
    f32 = jnp.float32

    def mm(a, name):                                  # one lane-dense MXU dot per folded layer
        off, h, w = _LAYOUT[name]
        return jnp.dot(a.astype(jnp.bfloat16), w_ref[off:off + h, 0:w],
                       preferred_element_type=f32)

    boff, bh, _bw = _LAYOUT["biases"]
    ball = w_ref[boff:boff + bh, :].astype(f32)       # all bias rows loaded once

    def bias(name, w):                                # (1, w) row, broadcast-add over agents
        j = _BIAS_ROWS.index(name)
        return ball[j:j + 1, 0:w]

    act = act_ref[...]                                # (A_pad, ACT_COLS) = [x_flat | ctx_flat]
    h = act[:, 0:INPUT_C * OBS]                       # trajectory lanes (prefix slice)

    # ---- TCN encoder: each conv is one dot against a host-folded block-Toeplitz matrix ----
    for i, (cin, cout, _d) in enumerate(TCN_LAYERS):
        wo = cout * OBS
        if f"l{i}_w1d" in _LAYOUT:                    # conv1 and 1x1 downsample share one dot
            y = mm(h, f"l{i}_w1d")                    # (A, 2*wo) = [conv1 | downsample]
            h1 = jnp.maximum(y[:, 0:wo] + bias(f"l{i}_b1", wo), 0.0)
            res = y[:, wo:2 * wo] + bias(f"l{i}_bd", wo)
        else:
            h1 = jnp.maximum(mm(h, f"l{i}_w1") + bias(f"l{i}_b1", wo), 0.0)
            res = (mm(h, f"l{i}_wd") + bias(f"l{i}_bd", wo)) if cin != cout else h
        h2 = jnp.maximum(mm(h1, f"l{i}_w2") + bias(f"l{i}_b2", wo), 0.0)
        h = jnp.maximum(h2 + res, 0.0)
    enc = h                                           # (A, N_CLASSES*OBS): flattened encoding

    # ---- context conv+linear and decoder x[-1]/x[-2] terms: one shared dot over act ----
    y = mm(act, "act_w")                              # (A, NCO + 12)
    ctx = jnp.maximum(y[:, 0:NCO] + bias("ctx_b", NCO), 0.0)
    xdec = y[:, NCO:NCO + 3 * N_CLASSES]

    # ---- decoder Linear + acc_to_abs: one concat + one dot ----
    feat = jnp.concatenate([enc, ctx], axis=1)        # (A, GAT_IN=36)
    out = mm(feat, "dec_g") + xdec + bias("dec_gb", 3 * N_CLASSES)
    out_ref[...] = out                                # (A, 3*N_CLASSES)


# ---------------- jitted core: layout prep + one single-grid-step pallas_call ---------------
@jax.jit
def _forward_core(x, context, w_slab):
    A = x.shape[2]
    a_pad = -(-A // 8) * 8                            # agents padded to a full sublane group
    xf = jnp.transpose(x, (2, 1, 0)).reshape(A, INPUT_C * OBS)
    cf = jnp.transpose(context, (2, 1, 0)).reshape(A, CTX_IN_C * CTX_LEN)
    act = jnp.concatenate([xf, cf], axis=1).astype(jnp.float32)   # one consolidated input
    act = jnp.pad(act, ((0, a_pad - A), (0, 0)))

    out = pl.pallas_call(
        fused_kernel,
        grid=(1,),
        in_specs=[
            pl.BlockSpec((a_pad, ACT_COLS), lambda i: (0, 0)),
            pl.BlockSpec((SLAB_ROWS, SLAB_W), lambda i: (0, 0)),
        ],
        out_specs=pl.BlockSpec((a_pad, 3 * N_CLASSES), lambda i: (0, 0)),
        out_shape=jax.ShapeDtypeStruct((a_pad, 3 * N_CLASSES), jnp.float32),
        compiler_params=pltpu.CompilerParams(dimension_semantics=("arbitrary",)),
    )(act, w_slab)

    return out[:A].reshape(A, 1, 3, N_CLASSES)


# ---------------- public wrapper (keeps the torch forward signature / return shape) ---------
def trajairnet_forward(x, y, adj, context, w_slab, sort=False):
    # y-encoder output never reaches the returned values; adj is unused by the reference
    # forward -> both accepted and ignored.
    del y, adj, sort
    A = x.shape[2]
    recon = _forward_core(x, context, w_slab)
    recon_y = [recon[a] for a in range(A)]   # list of (1, 3, N_CLASSES), as in the torch module
    return recon_y, [], []


# ---------------- main -----------------------------------------------------------------------
if __name__ == "__main__":
    key = jax.random.PRNGKey(0)
    kp, kx, ky, kc = jax.random.split(key, 4)
    params = init_params(kp)
    w_slab = pack_params(params)             # one-time host-side weight folding / packing

    # PyTorch-layout inputs: (time, channel, agent)
    x = jax.random.normal(kx, (OBS, INPUT_C, NUM_AGENTS), jnp.float32)
    y = jax.random.normal(ky, (Y_LEN, INPUT_C, NUM_AGENTS), jnp.float32)
    context = jax.random.normal(kc, (CTX_LEN, CTX_IN_C, NUM_AGENTS), jnp.float32)
    adj = jnp.ones((NUM_AGENTS, NUM_AGENTS), jnp.float32)

    recon_y, m, var = trajairnet_forward(x, y, adj, context, w_slab)
    jax.block_until_ready(recon_y)
    assert len(recon_y) == NUM_AGENTS and recon_y[0].shape == (1, 3, N_CLASSES)
    assert m == [] and var == []
    print("KERNEL_OK")
</pallas_src>

<mosaic_0001>
module attributes {stable_mosaic.version = 11 : i64} {
  func.func @fused_kernel(%arg0: i32, %arg1: memref<8x40xf32, #tpu.memory_space<vmem>>, %arg2: memref<688x128xbf16, #tpu.memory_space<vmem>>, %arg3: memref<8x12xf32, #tpu.memory_space<vmem>>) attributes {dimension_semantics = [#tpu.dimension_semantics<arbitrary>], iteration_bounds = array<i64: 1>, scalar_prefetch = 0 : i64, scratch_operands = 0 : i64, tpu.core_type = #tpu.core_type<tc>, window_params = [{pipeline_mode = #tpu.pipeline_mode<synchronous>, transform_indices = @transform_0, window_bounds = array<i64: 8, 40>}, {pipeline_mode = #tpu.pipeline_mode<synchronous>, transform_indices = @transform_1, window_bounds = array<i64: 688, 128>}, {pipeline_mode = #tpu.pipeline_mode<synchronous>, transform_indices = @transform_2, window_bounds = array<i64: 8, 12>}]} {
    %c672 = arith.constant 672 : index
    %c0 = arith.constant 0 : index
    %0 = vector.load %arg2[%c672, %c0] : memref<688x128xbf16, #tpu.memory_space<vmem>>, vector<16x128xbf16>
    %1 = arith.extf %0 : vector<16x128xbf16> to vector<16x128xf32>
    %c0_0 = arith.constant 0 : index
    %c0_1 = arith.constant 0 : index
    %2 = vector.load %arg1[%c0_0, %c0_1] : memref<8x40xf32, #tpu.memory_space<vmem>>, vector<8x40xf32>
    %3 = vector.extract_strided_slice %2 {offsets = [0, 0], sizes = [8, 24], strides = [1, 1]} : vector<8x40xf32> to vector<8x24xf32>
    %4 = arith.truncf %3 : vector<8x24xf32> to vector<8x24xbf16>
    %c0_2 = arith.constant 0 : index
    %c0_3 = arith.constant 0 : index
    %5 = vector.load %arg2[%c0_2, %c0_3] : memref<688x128xbf16, #tpu.memory_space<vmem>>, vector<24x128xbf16>
    %cst = arith.constant dense<0.000000e+00> : vector<8x128xf32>
    %6 = tpu.matmul %4, %5, %cst {dimension_numbers = #tpu.dot_dimension_numbers<[1], [0], [0], [1], [0, 0, 1, 1], [], []>} : vector<8x24xbf16>, vector<24x128xbf16>, vector<8x128xf32> -> vector<8x128xf32>
    %7 = vector.extract_strided_slice %1 {offsets = [0, 0], sizes = [1, 128], strides = [1, 1]} : vector<16x128xf32> to vector<1x128xf32>
    %8 = vector.broadcast %7 : vector<1x128xf32> to vector<8x128xf32>
    %9 = arith.addf %6, %8 : vector<8x128xf32>
    %cst_4 = arith.constant 0.000000e+00 : f32
    %10 = vector.broadcast %cst_4 : f32 to vector<8x128xf32>
    %11 = arith.maximumf %9, %10 : vector<8x128xf32>
    %12 = arith.truncf %3 : vector<8x24xf32> to vector<8x24xbf16>
    %c24 = arith.constant 24 : index
    %c0_5 = arith.constant 0 : index
    %13 = vector.load %arg2[%c24, %c0_5] : memref<688x128xbf16, #tpu.memory_space<vmem>>, vector<24x128xbf16>
    %cst_6 = arith.constant dense<0.000000e+00> : vector<8x128xf32>
    %14 = tpu.matmul %12, %13, %cst_6 {dimension_numbers = #tpu.dot_dimension_numbers<[1], [0], [0], [1], [0, 0, 1, 1], [], []>} : vector<8x24xbf16>, vector<24x128xbf16>, vector<8x128xf32> -> vector<8x128xf32>
    %15 = vector.extract_strided_slice %1 {offsets = [2, 0], sizes = [1, 128], strides = [1, 1]} : vector<16x128xf32> to vector<1x128xf32>
    %16 = vector.broadcast %15 : vector<1x128xf32> to vector<8x128xf32>
    %17 = arith.addf %14, %16 : vector<8x128xf32>
    %18 = arith.truncf %11 : vector<8x128xf32> to vector<8x128xbf16>
    %c48 = arith.constant 48 : index
    %c0_7 = arith.constant 0 : index
    %19 = vector.load %arg2[%c48, %c0_7] : memref<688x128xbf16, #tpu.memory_space<vmem>>, vector<128x128xbf16>
    %cst_8 = arith.constant dense<0.000000e+00> : vector<8x128xf32>
    %20 = tpu.matmul %18, %19, %cst_8 {dimension_numbers = #tpu.dot_dimension_numbers<[1], [0], [0], [1], [0, 0, 1, 1], [], []>} : vector<8x128xbf16>, vector<128x128xbf16>, vector<8x128xf32> -> vector<8x128xf32>
    %21 = vector.extract_strided_slice %1 {offsets = [1, 0], sizes = [1, 128], strides = [1, 1]} : vector<16x128xf32> to vector<1x128xf32>
    %22 = vector.broadcast %21 : vector<1x128xf32> to vector<8x128xf32>
    %23 = arith.addf %20, %22 : vector<8x128xf32>
    %cst_9 = arith.constant 0.000000e+00 : f32
    %24 = vector.broadcast %cst_9 : f32 to vector<8x128xf32>
    %25 = arith.maximumf %23, %24 : vector<8x128xf32>
    %26 = arith.addf %25, %17 : vector<8x128xf32>
    %cst_10 = arith.constant 0.000000e+00 : f32
    %27 = vector.broadcast %cst_10 : f32 to vector<8x128xf32>
    %28 = arith.maximumf %26, %27 : vector<8x128xf32>
    %29 = arith.truncf %28 : vector<8x128xf32> to vector<8x128xbf16>
    %c176 = arith.constant 176 : index
    %c0_11 = arith.constant 0 : index
    %30 = vector.load %arg2[%c176, %c0_11] : memref<688x128xbf16, #tpu.memory_space<vmem>>, vector<128x128xbf16>
    %cst_12 = arith.constant dense<0.000000e+00> : vector<8x128xf32>
    %31 = tpu.matmul %29, %30, %cst_12 {dimension_numbers = #tpu.dot_dimension_numbers<[1], [0], [0], [1], [0, 0, 1, 1], [], []>} : vector<8x128xbf16>, vector<128x128xbf16>, vector<8x128xf32> -> vector<8x128xf32>
    %32 = vector.extract_strided_slice %1 {offsets = [3, 0], sizes = [1, 128], strides = [1, 1]} : vector<16x128xf32> to vector<1x128xf32>
    %33 = vector.broadcast %32 : vector<1x128xf32> to vector<8x128xf32>
    %34 = arith.addf %31, %33 : vector<8x128xf32>
    %cst_13 = arith.constant 0.000000e+00 : f32
    %35 = vector.broadcast %cst_13 : f32 to vector<8x128xf32>
    %36 = arith.maximumf %34, %35 : vector<8x128xf32>
    %37 = arith.truncf %36 : vector<8x128xf32> to vector<8x128xbf16>
    %c304 = arith.constant 304 : index
    %c0_14 = arith.constant 0 : index
    %38 = vector.load %arg2[%c304, %c0_14] : memref<688x128xbf16, #tpu.memory_space<vmem>>, vector<128x128xbf16>
    %cst_15 = arith.constant dense<0.000000e+00> : vector<8x128xf32>
    %39 = tpu.matmul %37, %38, %cst_15 {dimension_numbers = #tpu.dot_dimension_numbers<[1], [0], [0], [1], [0, 0, 1, 1], [], []>} : vector<8x128xbf16>, vector<128x128xbf16>, vector<8x128xf32> -> vector<8x128xf32>
    %40 = vector.extract_strided_slice %1 {offsets = [4, 0], sizes = [1, 128], strides = [1, 1]} : vector<16x128xf32> to vector<1x128xf32>
    %41 = vector.broadcast %40 : vector<1x128xf32> to vector<8x128xf32>
    %42 = arith.addf %39, %41 : vector<8x128xf32>
    %cst_16 = arith.constant 0.000000e+00 : f32
    %43 = vector.broadcast %cst_16 : f32 to vector<8x128xf32>
    %44 = arith.maximumf %42, %43 : vector<8x128xf32>
    %45 = arith.addf %44, %28 : vector<8x128xf32>
    %cst_17 = arith.constant 0.000000e+00 : f32
    %46 = vector.broadcast %cst_17 : f32 to vector<8x128xf32>
    %47 = arith.maximumf %45, %46 : vector<8x128xf32>
    %48 = arith.truncf %47 : vector<8x128xf32> to vector<8x128xbf16>
    %c432 = arith.constant 432 : index
    %c0_18 = arith.constant 0 : index
    %49 = vector.load %arg2[%c432, %c0_18] : memref<688x128xbf16, #tpu.memory_space<vmem>>, vector<128x64xbf16>
    %cst_19 = arith.constant dense<0.000000e+00> : vector<8x64xf32>
    %50 = tpu.matmul %48, %49, %cst_19 {dimension_numbers = #tpu.dot_dimension_numbers<[1], [0], [0], [1], [0, 0, 1, 1], [], []>} : vector<8x128xbf16>, vector<128x64xbf16>, vector<8x64xf32> -> vector<8x64xf32>
    %51 = vector.extract_strided_slice %50 {offsets = [0, 0], sizes = [8, 32], strides = [1, 1]} : vector<8x64xf32> to vector<8x32xf32>
    %52 = vector.extract_strided_slice %1 {offsets = [5, 0], sizes = [1, 32], strides = [1, 1]} : vector<16x128xf32> to vector<1x32xf32>
    %53 = vector.broadcast %52 : vector<1x32xf32> to vector<8x32xf32>
    %54 = arith.addf %51, %53 : vector<8x32xf32>
    %cst_20 = arith.constant 0.000000e+00 : f32
    %55 = vector.broadcast %cst_20 : f32 to vector<8x32xf32>
    %56 = arith.maximumf %54, %55 : vector<8x32xf32>
    %57 = vector.extract_strided_slice %50 {offsets = [0, 32], sizes = [8, 32], strides = [1, 1]} : vector<8x64xf32> to vector<8x32xf32>
    %58 = vector.extract_strided_slice %1 {offsets = [7, 0], sizes = [1, 32], strides = [1, 1]} : vector<16x128xf32> to vector<1x32xf32>
    %59 = vector.broadcast %58 : vector<1x32xf32> to vector<8x32xf32>
    %60 = arith.addf %57, %59 : vector<8x32xf32>
    %61 = arith.truncf %56 : vector<8x32xf32> to vector<8x32xbf16>
    %c560 = arith.constant 560 : index
    %c0_21 = arith.constant 0 : index
    %62 = vector.load %arg2[%c560, %c0_21] : memref<688x128xbf16, #tpu.memory_space<vmem>>, vector<32x32xbf16>
    %cst_22 = arith.constant dense<0.000000e+00> : vector<8x32xf32>
    %63 = tpu.matmul %61, %62, %cst_22 {dimension_numbers = #tpu.dot_dimension_numbers<[1], [0], [0], [1], [0, 0, 1, 1], [], []>} : vector<8x32xbf16>, vector<32x32xbf16>, vector<8x32xf32> -> vector<8x32xf32>
    %64 = vector.extract_strided_slice %1 {offsets = [6, 0], sizes = [1, 32], strides = [1, 1]} : vector<16x128xf32> to vector<1x32xf32>
    %65 = vector.broadcast %64 : vector<1x32xf32> to vector<8x32xf32>
    %66 = arith.addf %63, %65 : vector<8x32xf32>
    %cst_23 = arith.constant 0.000000e+00 : f32
    %67 = vector.broadcast %cst_23 : f32 to vector<8x32xf32>
    %68 = arith.maximumf %66, %67 : vector<8x32xf32>
    %69 = arith.addf %68, %60 : vector<8x32xf32>
    %cst_24 = arith.constant 0.000000e+00 : f32
    %70 = vector.broadcast %cst_24 : f32 to vector<8x32xf32>
    %71 = arith.maximumf %69, %70 : vector<8x32xf32>
    %72 = arith.truncf %2 : vector<8x40xf32> to vector<8x40xbf16>
    %c592 = arith.constant 592 : index
    %c0_25 = arith.constant 0 : index
    %73 = vector.load %arg2[%c592, %c0_25] : memref<688x128xbf16, #tpu.memory_space<vmem>>, vector<40x16xbf16>
    %cst_26 = arith.constant dense<0.000000e+00> : vector<8x16xf32>
    %74 = tpu.matmul %72, %73, %cst_26 {dimension_numbers = #tpu.dot_dimension_numbers<[1], [0], [0], [1], [0, 0, 1, 1], [], []>} : vector<8x40xbf16>, vector<40x16xbf16>, vector<8x16xf32> -> vector<8x16xf32>
    %75 = vector.extract_strided_slice %74 {offsets = [0, 0], sizes = [8, 4], strides = [1, 1]} : vector<8x16xf32> to vector<8x4xf32>
    %76 = vector.extract_strided_slice %1 {offsets = [8, 0], sizes = [1, 4], strides = [1, 1]} : vector<16x128xf32> to vector<1x4xf32>
    %77 = vector.broadcast %76 : vector<1x4xf32> to vector<8x4xf32>
    %78 = arith.addf %75, %77 : vector<8x4xf32>
    %cst_27 = arith.constant 0.000000e+00 : f32
    %79 = vector.broadcast %cst_27 : f32 to vector<8x4xf32>
    %80 = arith.maximumf %78, %79 : vector<8x4xf32>
    %81 = vector.extract_strided_slice %74 {offsets = [0, 4], sizes = [8, 12], strides = [1, 1]} : vector<8x16xf32> to vector<8x12xf32>
    %82 = tpu.concatenate %71, %80 in 1 : vector<8x32xf32>, vector<8x4xf32> -> vector<8x36xf32>
    %83 = arith.truncf %82 : vector<8x36xf32> to vector<8x36xbf16>
    %c632 = arith.constant 632 : index
    %c0_28 = arith.constant 0 : index
    %84 = vector.load %arg2[%c632, %c0_28] : memref<688x128xbf16, #tpu.memory_space<vmem>>, vector<36x12xbf16>
    %cst_29 = arith.constant dense<0.000000e+00> : vector<8x12xf32>
    %85 = tpu.matmul %83, %84, %cst_29 {dimension_numbers = #tpu.dot_dimension_numbers<[1], [0], [0], [1], [0, 0, 1, 1], [], []>} : vector<8x36xbf16>, vector<36x12xbf16>, vector<8x12xf32> -> vector<8x12xf32>
    %86 = arith.addf %85, %81 : vector<8x12xf32>
    %87 = vector.extract_strided_slice %1 {offsets = [9, 0], sizes = [1, 12], strides = [1, 1]} : vector<16x128xf32> to vector<1x12xf32>
    %88 = vector.broadcast %87 : vector<1x12xf32> to vector<8x12xf32>
    %89 = arith.addf %86, %88 : vector<8x12xf32>
    %c0_30 = arith.constant 0 : index
    %c0_31 = arith.constant 0 : index
    %90 = vector.load %arg3[%c0_30, %c0_31] : memref<8x12xf32, #tpu.memory_space<vmem>>, vector<8x12xf32>
    tpu.vector_store %arg3[%c0_30, %c0_31], %89 {strides = array<i32>} : memref<8x12xf32, #tpu.memory_space<vmem>>, vector<8x12xf32>,
    return
  }
  func.func @transform_0(%arg0: i32) -> (i32, i32) {
    %c0_i32 = arith.constant 0 : i32
    %c0_i32_0 = arith.constant 0 : i32
    %c0_i32_1 = arith.constant 0 : i32
    return %c0_i32, %c0_i32_0 : i32, i32
  }
  func.func @transform_1(%arg0: i32) -> (i32, i32) {
    %c0_i32 = arith.constant 0 : i32
    %c0_i32_0 = arith.constant 0 : i32
    %c0_i32_1 = arith.constant 0 : i32
    return %c0_i32, %c0_i32_0 : i32, i32
  }
  func.func @transform_2(%arg0: i32) -> (i32, i32) {
    %c0_i32 = arith.constant 0 : i32
    %c0_i32_0 = arith.constant 0 : i32
    %c0_i32_1 = arith.constant 0 : i32
    return %c0_i32, %c0_i32_0 : i32, i32
  }
}

</mosaic_0001>

<llo_original>
// kernel: _forward_core.1
$region0: #{_forward_core.1}
  #allocation0 [shape = 'u32[]', space=smem, size = 0x4, offset = 0x4, fixed_abs, tag = 'smem constant byte address 0x4 - core index']
  #allocation1 [shape = 'u32[144,128]{1,0:T(1,128)}', space=vmem, size = 0x12000, scoped, tag = 'internal scratch']
  %s0 = inlined_call_operand.vmem [shape: f32[8,40], index: 0, kind: input, shape index: {}]
  %s1 = inlined_call_operand.hbm [shape: bf16[688,128], index: 1, kind: input, shape index: {}]
  %s2 = inlined_call_operand.vmem [shape: f32[8,12], index: 2, kind: output, shape index: {}]
  %s3 = sld [smem:[#allocation0]]
  $region22: #{_forward_core.1} parent=0
    _
  %s5 = ssub.s32 1, %s3
  %s6 = scalar_select 0, %s5, %s3
  $region1: #{_forward_core.1} parent=0
    #allocation2 [shape = 'u8[176128]{0}', space=vmem, size = 0x2b000, scoped, tag = 'input window, operand 1, single buffered']
    #allocation3 [shape = 's32[1]{0}', space=sflag, size = 0x4, scoped, tag = 'scoped memory for _forward_core.1']
    %7 = vsyncpa [#allocation3], 0
    // Predicated region
    $region2: #{_forward_core.1} parent=1 // pred_check
      _
    $region3: #{_forward_core.1} parent=1 // pred_check_branch
      %9 = sbr.rel (0) target = $region5
    $region4: #{_forward_core.1} parent=1 // pred_region
      _
    $region5: #{_forward_core.1} parent=1 // pred_fallthru
      _
    // Predicated region
    $region6: #{_forward_core.1} parent=1 // pred_check
      _
    $region7: #{_forward_core.1} parent=1 // pred_check_branch
      %11 = sbr.rel (0) target = $region9
    $region8: #{_forward_core.1} parent=1 // pred_region
      %s13 = ssub.s32 5504, 5504
      %14 = vsyncadd [#allocation3], %s13
      %s15 = sshll.u32 [#allocation2], 4
      %s16 = int_to_ptr.vmem [resolvable:$true] %s15
      %21 = dma.hbm_to_vmem [thread:$0]  %s1, 5504, %s16, [#allocation3], 64, 64, 4
    $region9: #{_forward_core.1} parent=1 // pred_fallthru
      _
    // Predicated region
    $region10: #{_forward_core.1} parent=1 // pred_check
      _
    $region11: #{_forward_core.1} parent=1 // pred_check_branch
      %23 = sbr.rel (0) target = $region13
    $region12: #{_forward_core.1} parent=1 // pred_region
      %24 = dma.done [#allocation3], 5504
    $region13: #{_forward_core.1} parent=1 // pred_fallthru
      _
    %v26 = vld [vmem:[#allocation2 + $0x150] sm:$0xf]
    %v27 = vld [vmem:[#allocation2 + $0x154] sm:$0xf]
    %v28 = vunpack.c.l.bf16 %v26
    %v29 = vunpack.c.l.bf16 %v27
    %v30 = vld [vmem:[%s0] sm:$0xff]
    %v31 = vpack.c.bf16 %v30, %v30
    %v32 = vld [vmem:[#allocation2] sm:$0xf]
    %v33 = vld [vmem:[#allocation2 + $0x4] sm:$0xf]
    %v34 = vld [vmem:[#allocation2 + $0x8] sm:$0xf]
    %v35 = vlaneseq
    %v36 = vshrl.u32 %v35, 7
    %v37 = vsub.s32 0, %v36
    %v38 = vrot.slane %v28, %v37
    %v42 = vunpack.c.l.b16 %v32
    %v43 = vunpack.c.l.b16 %v33
    %v44 = vunpack.c.l.b16 %v34
    %v45 = vpack.c.b16 %v43, %v42
    %v46 = vpack.c.b16 %v44, %v44
    %vm48 = vcmask 195584
    %v50 = vsel %vm48, %v31, 0
    %vm52 = vcmask 1043456
    %v54 = vsel %vm52, %v46, 0
    %56 = vmatprep.subr.bf16.mxu0 0
    %57 = vmatpush1.bf16.msra.mxu0 0
    %58 = vmatprep.subr.bf16.mxu0 0
    %59 = vmatpush1.bf16.msra.mxu0 0
    %60 = vmatprep.subr.bf16.mxu0 0
    %61 = vmatpush1.bf16.msra.mxu0 0
    %62 = vmatprep.subr.bf16.mxu0 0
    %63 = vmatpush1.bf16.msra.mxu0 0
    %64 = vmatprep.subr.bf16.mxu0 0
    %65 = vmatpush1.bf16.msra.mxu0 0
    %66 = vmatprep.subr.bf16.mxu0 0
    %67 = vmatpush1.bf16.msra.mxu0 0
    %68 = vmatprep.subr.bf16.mxu0 0
    %69 = vmatpush1.bf16.msra.mxu0 %v54
    %70 = vmatprep.subr.bf16.mxu0 0
    %71 = vmatpush1.bf16.msra.mxu0 %v45
    %72 = vmatprep.subr.bf16.mxu0 0
    %73 = vmatpush2.bf16.msra.mxu0 0
    %74 = vmatprep.subr.bf16.mxu0 0
    %75 = vmatpush2.bf16.msra.mxu0 0
    %76 = vmatprep.subr.bf16.mxu0 0
    %77 = vmatpush2.bf16.msra.mxu0 0
    %78 = vmatprep.subr.bf16.mxu0 0
    %79 = vmatpush2.bf16.msra.mxu0 0
    %80 = vmatprep.subr.bf16.mxu0 0
    %81 = vmatpush2.bf16.msra.mxu0 0
    %82 = vmatprep.subr.bf16.mxu0 0
    %83 = vmatpush2.bf16.msra.mxu0 0
    %84 = vmatprep.subr.bf16.mxu0 0
    %85 = vmatpush2.bf16.msra.mxu0 0
    %86 = vmatprep.subr.bf16.mxu0 0
    %87 = vmatpush2.bf16.msra.mxu0 0
    %88 = vmatprep.mubr.bf16.mxu0 0
    %89 = vmatmul.mubr.bf16.gmra.mxu0 %v50
    %v90 = vpop.f32.mrf.mxu0
    %v91 = vadd.f32 %v38, %v90
    %v92 = vpop.f32.mrf.mxu0
    %v93 = vpop.f32.mrf.mxu0
    %v94 = vpop.f32.mrf.mxu0
    %95 = vdwg.mxu0
    %v96 = vmax.f32 %v91, 0.0
    %v97 = vld [vmem:[#allocation2 + $0xc] sm:$0xf]
    %v98 = vld [vmem:[#allocation2 + $0x10] sm:$0xf]
    %v99 = vld [vmem:[#allocation2 + $0x14] sm:$0xf]
    %v100 = vlaneseq
    %v101 = vshrl.u32 %v100, 7
    %v102 = vsub.s32 2, %v101
    %v103 = vrot.slane %v28, %v102
    %v107 = vunpack.c.l.b16 %v97
    %v108 = vunpack.c.l.b16 %v98
    %v109 = vunpack.c.l.b16 %v99
    %v110 = vpack.c.b16 %v108, %v107
    %v111 = vpack.c.b16 %v109, %v109
    %v114 = vsel %vm52, %v111, 0
    %116 = vmatprep.subr.bf16.mxu0 0
    %117 = vmatpush1.bf16.msra.mxu0 0
    %118 = vmatprep.subr.bf16.mxu0 0
    %119 = vmatpush1.bf16.msra.mxu0 0
    %120 = vmatprep.subr.bf16.mxu0 0
    %121 = vmatpush1.bf16.msra.mxu0 0
    %122 = vmatprep.subr.bf16.mxu0 0
    %123 = vmatpush1.bf16.msra.mxu0 0
    %124 = vmatprep.subr.bf16.mxu0 0
    %125 = vmatpush1.bf16.msra.mxu0 0
    %126 = vmatprep.subr.bf16.mxu0 0
    %127 = vmatpush1.bf16.msra.mxu0 0
    %128 = vmatprep.subr.bf16.mxu0 0
    %129 = vmatpush1.bf16.msra.mxu0 %v114
    %130 = vmatprep.subr.bf16.mxu0 0
    %131 = vmatpush1.bf16.msra.mxu0 %v110
    %132 = vmatprep.subr.bf16.mxu0 0
    %133 = vmatpush2.bf16.msra.mxu0 0
    %134 = vmatprep.subr.bf16.mxu0 0
    %135 = vmatpush2.bf16.msra.mxu0 0
    %136 = vmatprep.subr.bf16.mxu0 0
    %137 = vmatpush2.bf16.msra.mxu0 0
    %138 = vmatprep.subr.bf16.mxu0 0
    %139 = vmatpush2.bf16.msra.mxu0 0
    %140 = vmatprep.subr.bf16.mxu0 0
    %141 = vmatpush2.bf16.msra.mxu0 0
    %142 = vmatprep.subr.bf16.mxu0 0
    %143 = vmatpush2.bf16.msra.mxu0 0
    %144 = vmatprep.subr.bf16.mxu0 0
    %145 = vmatpush2.bf16.msra.mxu0 0
    %146 = vmatprep.subr.bf16.mxu0 0
    %147 = vmatpush2.bf16.msra.mxu0 0
    %148 = vmatprep.mubr.bf16.mxu0 0
    %149 = vmatmul.mubr.bf16.gmra.mxu0 %v50
    %v150 = vpop.f32.mrf.mxu0
    %v151 = vadd.f32 %v103, %v150
    %v152 = vpop.f32.mrf.mxu0
    %v153 = vpop.f32.mrf.mxu0
    %v154 = vpop.f32.mrf.mxu0
    %155 = vdwg.mxu0
    %v156 = vpack.c.bf16 %v96, %v96
    %v157 = vld [vmem:[#allocation2 + $0x18] sm:$0xf]
    %v158 = vld [vmem:[#allocation2 + $0x1c] sm:$0xf]
    %v159 = vld [vmem:[#allocation2 + $0x20] sm:$0xf]
    %v160 = vld [vmem:[#allocation2 + $0x24] sm:$0xf]
    %v161 = vld [vmem:[#allocation2 + $0x28] sm:$0xf]
    %v162 = vld [vmem:[#allocation2 + $0x2c] sm:$0xf]
    %v163 = vld [vmem:[#allocation2 + $0x30] sm:$0xf]
    %v164 = vld [vmem:[#allocation2 + $0x34] sm:$0xf]
    %v165 = vld [vmem:[#allocation2 + $0x38] sm:$0xf]
    %v166 = vld [vmem:[#allocation2 + $0x3c] sm:$0xf]
    %v167 = vld [vmem:[#allocation2 + $0x40] sm:$0xf]
    %v168 = vld [vmem:[#allocation2 + $0x44] sm:$0xf]
    %v169 = vld [vmem:[#allocation2 + $0x48] sm:$0xf]
    %v170 = vld [vmem:[#allocation2 + $0x4c] sm:$0xf]
    %v171 = vld [vmem:[#allocation2 + $0x50] sm:$0xf]
    %v172 = vld [vmem:[#allocation2 + $0x54] sm:$0xf]
    %v173 = vlaneseq
    %v174 = vshrl.u32 %v173, 7
    %v175 = vsub.s32 1, %v174
    %v176 = vrot.slane %v28, %v175
    %v193 = vunpack.c.l.b16 %v157
    %v194 = vunpack.c.l.b16 %v158
    %v195 = vunpack.c.l.b16 %v159
    %v196 = vunpack.c.l.b16 %v160
    %v197 = vunpack.c.l.b16 %v161
    %v198 = vunpack.c.l.b16 %v162
    %v199 = vunpack.c.l.b16 %v163
    %v200 = vunpack.c.l.b16 %v164
    %v201 = vunpack.c.l.b16 %v165
    %v202 = vunpack.c.l.b16 %v166
    %v203 = vunpack.c.l.b16 %v167
    %v204 = vunpack.c.l.b16 %v168
    %v205 = vunpack.c.l.b16 %v169
    %v206 = vunpack.c.l.b16 %v170
    %v207 = vunpack.c.l.b16 %v171
    %v208 = vunpack.c.l.b16 %v172
    %v209 = vpack.c.b16 %v194, %v193
    %v210 = vpack.c.b16 %v196, %v195
    %v211 = vpack.c.b16 %v198, %v197
    %v212 = vpack.c.b16 %v200, %v199
    %v213 = vpack.c.b16 %v202, %v201
    %v214 = vpack.c.b16 %v204, %v203
    %v215 = vpack.c.b16 %v206, %v205
    %v216 = vpack.c.b16 %v208, %v207
    %225 = vmatprep.subr.bf16.mxu0 0
    %226 = vmatpush1.bf16.msra.mxu0 %v216
    %227 = vmatprep.subr.bf16.mxu0 0
    %228 = vmatpush1.bf16.msra.mxu0 %v215
    %229 = vmatprep.subr.bf16.mxu0 0
    %230 = vmatpush1.bf16.msra.mxu0 %v214
    %231 = vmatprep.subr.bf16.mxu0 0
    %232 = vmatpush1.bf16.msra.mxu0 %v213
    %233 = vmatprep.subr.bf16.mxu0 0
    %234 = vmatpush1.bf16.msra.mxu0 %v212
    %235 = vmatprep.subr.bf16.mxu0 0
    %236 = vmatpush1.bf16.msra.mxu0 %v211
    %237 = vmatprep.subr.bf16.mxu0 0
    %238 = vmatpush1.bf16.msra.mxu0 %v210
    %239 = vmatprep.subr.bf16.mxu0 0
    %240 = vmatpush1.bf16.msra.mxu0 %v209
    %241 = vmatprep.subr.bf16.mxu0 0
    %242 = vmatpush2.bf16.msra.mxu0 0
    %243 = vmatprep.subr.bf16.mxu0 0
    %244 = vmatpush2.bf16.msra.mxu0 0
    %245 = vmatprep.subr.bf16.mxu0 0
    %246 = vmatpush2.bf16.msra.mxu0 0
    %247 = vmatprep.subr.bf16.mxu0 0
    %248 = vmatpush2.bf16.msra.mxu0 0
    %249 = vmatprep.subr.bf16.mxu0 0
    %250 = vmatpush2.bf16.msra.mxu0 0
    %251 = vmatprep.subr.bf16.mxu0 0
    %252 = vmatpush2.bf16.msra.mxu0 0
    %253 = vmatprep.subr.bf16.mxu0 0
    %254 = vmatpush2.bf16.msra.mxu0 0
    %255 = vmatprep.subr.bf16.mxu0 0
    %256 = vmatpush2.bf16.msra.mxu0 0
    %257 = vmatprep.mubr.bf16.mxu0 0
    %258 = vmatmul.mubr.bf16.gmra.mxu0 %v156
    %v259 = vpop.f32.mrf.mxu0
    %v260 = vadd.f32 %v176, %v259
    %v261 = vpop.f32.mrf.mxu0
    %v262 = vpop.f32.mrf.mxu0
    %v263 = vpop.f32.mrf.mxu0
    %264 = vdwg.mxu0
    %v265 = vmax.f32 %v260, 0.0
    %v266 = vadd.f32 %v265, %v151
    %v267 = vmax.f32 %v266, 0.0
    %v268 = vpack.c.bf16 %v267, %v267
    %v269 = vld [vmem:[#allocation2 + $0x58] sm:$0xf]
    %v270 = vld [vmem:[#allocation2 + $0x5c] sm:$0xf]
    %v271 = vld [vmem:[#allocation2 + $0x60] sm:$0xf]
    %v272 = vld [vmem:[#allocation2 + $0x64] sm:$0xf]
    %v273 = vld [vmem:[#allocation2 + $0x68] sm:$0xf]
    %v274 = vld [vmem:[#allocation2 + $0x6c] sm:$0xf]
    %v275 = vld [vmem:[#allocation2 + $0x70] sm:$0xf]
    %v276 = vld [vmem:[#allocation2 + $0x74] sm:$0xf]
    %v277 = vld [vmem:[#allocation2 + $0x78] sm:$0xf]
    %v278 = vld [vmem:[#allocation2 + $0x7c] sm:$0xf]
    %v279 = vld [vmem:[#allocation2 + $0x80] sm:$0xf]
    %v280 = vld [vmem:[#allocation2 + $0x84] sm:$0xf]
    %v281 = vld [vmem:[#allocation2 + $0x88] sm:$0xf]
    %v282 = vld [vmem:[#allocation2 + $0x8c] sm:$0xf]
    %v283 = vld [vmem:[#allocation2 + $0x90] sm:$0xf]
    %v284 = vld [vmem:[#allocation2 + $0x94] sm:$0xf]
    %v285 = vlaneseq
    %v286 = vshrl.u32 %v285, 7
    %v287 = vsub.s32 3, %v286
    %v288 = vrot.slane %v28, %v287
    %v305 = vunpack.c.l.b16 %v269
    %v306 = vunpack.c.l.b16 %v270
    %v307 = vunpack.c.l.b16 %v271
    %v308 = vunpack.c.l.b16 %v272
    %v309 = vunpack.c.l.b16 %v273
    %v310 = vunpack.c.l.b16 %v274
    %v311 = vunpack.c.l.b16 %v275
    %v312 = vunpack.c.l.b16 %v276
    %v313 = vunpack.c.l.b16 %v277
    %v314 = vunpack.c.l.b16 %v278
    %v315 = vunpack.c.l.b16 %v279
    %v316 = vunpack.c.l.b16 %v280
    %v317 = vunpack.c.l.b16 %v281
    %v318 = vunpack.c.l.b16 %v282
    %v319 = vunpack.c.l.b16 %v283
    %v320 = vunpack.c.l.b16 %v284
    %v321 = vpack.c.b16 %v306, %v305
    %v322 = vpack.c.b16 %v308, %v307
    %v323 = vpack.c.b16 %v310, %v309
    %v324 = vpack.c.b16 %v312, %v311
    %v325 = vpack.c.b16 %v314, %v313
    %v326 = vpack.c.b16 %v316, %v315
    %v327 = vpack.c.b16 %v318, %v317
    %v328 = vpack.c.b16 %v320, %v319
    %337 = vmatprep.subr.bf16.mxu0 0
    %338 = vmatpush1.bf16.msra.mxu0 %v328
    %339 = vmatprep.subr.bf16.mxu0 0
    %340 = vmatpush1.bf16.msra.mxu0 %v327
    %341 = vmatprep.subr.bf16.mxu0 0
    %342 = vmatpush1.bf16.msra.mxu0 %v326
    %343 = vmatprep.subr.bf16.mxu0 0
    %344 = vmatpush1.bf16.msra.mxu0 %v325
    %345 = vmatprep.subr.bf16.mxu0 0
    %346 = vmatpush1.bf16.msra.mxu0 %v324
    %347 = vmatprep.subr.bf16.mxu0 0
    %348 = vmatpush1.bf16.msra.mxu0 %v323
    %349 = vmatprep.subr.bf16.mxu0 0
    %350 = vmatpush1.bf16.msra.mxu0 %v322
    %351 = vmatprep.subr.bf16.mxu0 0
    %352 = vmatpush1.bf16.msra.mxu0 %v321
    %353 = vmatprep.subr.bf16.mxu0 0
    %354 = vmatpush2.bf16.msra.mxu0 0
    %355 = vmatprep.subr.bf16.mxu0 0
    %356 = vmatpush2.bf16.msra.mxu0 0
    %357 = vmatprep.subr.bf16.mxu0 0
    %358 = vmatpush2.bf16.msra.mxu0 0
    %359 = vmatprep.subr.bf16.mxu0 0
    %360 = vmatpush2.bf16.msra.mxu0 0
    %361 = vmatprep.subr.bf16.mxu0 0
    %362 = vmatpush2.bf16.msra.mxu0 0
    %363 = vmatprep.subr.bf16.mxu0 0
    %364 = vmatpush2.bf16.msra.mxu0 0
    %365 = vmatprep.subr.bf16.mxu0 0
    %366 = vmatpush2.bf16.msra.mxu0 0
    %367 = vmatprep.subr.bf16.mxu0 0
    %368 = vmatpush2.bf16.msra.mxu0 0
    %369 = vmatprep.mubr.bf16.mxu0 0
    %370 = vmatmul.mubr.bf16.gmra.mxu0 %v268
    %v371 = vpop.f32.mrf.mxu0
    %v372 = vadd.f32 %v288, %v371
    %v373 = vpop.f32.mrf.mxu0
    %v374 = vpop.f32.mrf.mxu0
    %v375 = vpop.f32.mrf.mxu0
    %376 = vdwg.mxu0
    %v377 = vmax.f32 %v372, 0.0
    %v378 = vpack.c.bf16 %v377, %v377
    %v379 = vld [vmem:[#allocation2 + $0x98] sm:$0xf]
    %v380 = vld [vmem:[#allocation2 + $0x9c] sm:$0xf]
    %v381 = vld [vmem:[#allocation2 + $0xa0] sm:$0xf]
    %v382 = vld [vmem:[#allocation2 + $0xa4] sm:$0xf]
    %v383 = vld [vmem:[#allocation2 + $0xa8] sm:$0xf]
    %v384 = vld [vmem:[#allocation2 + $0xac] sm:$0xf]
    %v385 = vld [vmem:[#allocation2 + $0xb0] sm:$0xf]
    %v386 = vld [vmem:[#allocation2 + $0xb4] sm:$0xf]
    %v387 = vld [vmem:[#allocation2 + $0xb8] sm:$0xf]
    %v388 = vld [vmem:[#allocation2 + $0xbc] sm:$0xf]
    %v389 = vld [vmem:[#allocation2 + $0xc0] sm:$0xf]
    %v390 = vld [vmem:[#allocation2 + $0xc4] sm:$0xf]
    %v391 = vld [vmem:[#allocation2 + $0xc8] sm:$0xf]
    %v392 = vld [vmem:[#allocation2 + $0xcc] sm:$0xf]
    %v393 = vld [vmem:[#allocation2 + $0xd0] sm:$0xf]
    %v394 = vld [vmem:[#allocation2 + $0xd4] sm:$0xf]
    %v395 = vlaneseq
    %v396 = vshrl.u32 %v395, 7
    %v397 = vsub.s32 4, %v396
    %v398 = vrot.slane %v28, %v397
    %v415 = vunpack.c.l.b16 %v379
    %v416 = vunpack.c.l.b16 %v380
    %v417 = vunpack.c.l.b16 %v381
    %v418 = vunpack.c.l.b16 %v382
    %v419 = vunpack.c.l.b16 %v383
    %v420 = vunpack.c.l.b16 %v384
    %v421 = vunpack.c.l.b16 %v385
    %v422 = vunpack.c.l.b16 %v386
    %v423 = vunpack.c.l.b16 %v387
    %v424 = vunpack.c.l.b16 %v388
    %v425 = vunpack.c.l.b16 %v389
    %v426 = vunpack.c.l.b16 %v390
    %v427 = vunpack.c.l.b16 %v391
    %v428 = vunpack.c.l.b16 %v392
    %v429 = vunpack.c.l.b16 %v393
    %v430 = vunpack.c.l.b16 %v394
    %v431 = vpack.c.b16 %v416, %v415
    %v432 = vpack.c.b16 %v418, %v417
    %v433 = vpack.c.b16 %v420, %v419
    %v434 = vpack.c.b16 %v422, %v421
    %v435 = vpack.c.b16 %v424, %v423
    %v436 = vpack.c.b16 %v426, %v425
    %v437 = vpack.c.b16 %v428, %v427
    %v438 = vpack.c.b16 %v430, %v429
    %447 = vmatprep.subr.bf16.mxu0 0
    %448 = vmatpush1.bf16.msra.mxu0 %v438
    %449 = vmatprep.subr.bf16.mxu0 0
    %450 = vmatpush1.bf16.msra.mxu0 %v437
    %451 = vmatprep.subr.bf16.mxu0 0
    %452 = vmatpush1.bf16.msra.mxu0 %v436
    %453 = vmatprep.subr.bf16.mxu0 0
    %454 = vmatpush1.bf16.msra.mxu0 %v435
    %455 = vmatprep.subr.bf16.mxu0 0
    %456 = vmatpush1.bf16.msra.mxu0 %v434
    %457 = vmatprep.subr.bf16.mxu0 0
    %458 = vmatpush1.bf16.msra.mxu0 %v433
    %459 = vmatprep.subr.bf16.mxu0 0
    %460 = vmatpush1.bf16.msra.mxu0 %v432
    %461 = vmatprep.subr.bf16.mxu0 0
    %462 = vmatpush1.bf16.msra.mxu0 %v431
    %463 = vmatprep.subr.bf16.mxu0 0
    %464 = vmatpush2.bf16.msra.mxu0 0
    %465 = vmatprep.subr.bf16.mxu0 0
    %466 = vmatpush2.bf16.msra.mxu0 0
    %467 = vmatprep.subr.bf16.mxu0 0
    %468 = vmatpush2.bf16.msra.mxu0 0
    %469 = vmatprep.subr.bf16.mxu0 0
    %470 = vmatpush2.bf16.msra.mxu0 0
    %471 = vmatprep.subr.bf16.mxu0 0
    %472 = vmatpush2.bf16.msra.mxu0 0
    %473 = vmatprep.subr.bf16.mxu0 0
    %474 = vmatpush2.bf16.msra.mxu0 0
    %475 = vmatprep.subr.bf16.mxu0 0
    %476 = vmatpush2.bf16.msra.mxu0 0
    %477 = vmatprep.subr.bf16.mxu0 0
    %478 = vmatpush2.bf16.msra.mxu0 0
    %479 = vmatprep.mubr.bf16.mxu0 0
    %480 = vmatmul.mubr.bf16.gmra.mxu0 %v378
    %v481 = vpop.f32.mrf.mxu0
    %v482 = vadd.f32 %v398, %v481
    %v483 = vpop.f32.mrf.mxu0
    %v484 = vpop.f32.mrf.mxu0
    %v485 = vpop.f32.mrf.mxu0
    %486 = vdwg.mxu0
    %v487 = vmax.f32 %v482, 0.0
    %v488 = vadd.f32 %v487, %v267
    %v489 = vmax.f32 %v488, 0.0
    %v490 = vpack.c.bf16 %v489, %v489
    %v491 = vld [vmem:[#allocation2 + $0xd8] sm:$0xf]
    %v492 = vld [vmem:[#allocation2 + $0xdc] sm:$0xf]
    %v493 = vld [vmem:[#allocation2 + $0xe0] sm:$0xf]
    %v494 = vld [vmem:[#allocation2 + $0xe4] sm:$0xf]
    %v495 = vld [vmem:[#allocation2 + $0xe8] sm:$0xf]
    %v496 = vld [vmem:[#allocation2 + $0xec] sm:$0xf]
    %v497 = vld [vmem:[#allocation2 + $0xf0] sm:$0xf]
    %v498 = vld [vmem:[#allocation2 + $0xf4] sm:$0xf]
    %v499 = vld [vmem:[#allocation2 + $0xf8] sm:$0xf]
    %v500 = vld [vmem:[#allocation2 + $0xfc] sm:$0xf]
    %v501 = vld [vmem:[#allocation2 + $0x100] sm:$0xf]
    %v502 = vld [vmem:[#allocation2 + $0x104] sm:$0xf]
    %v503 = vld [vmem:[#allocation2 + $0x108] sm:$0xf]
    %v504 = vld [vmem:[#allocation2 + $0x10c] sm:$0xf]
    %v505 = vld [vmem:[#allocation2 + $0x110] sm:$0xf]
    %v506 = vld [vmem:[#allocation2 + $0x114] sm:$0xf]
    %v523 = vunpack.c.l.b16 %v491
    %v524 = vunpack.c.l.b16 %v492
    %v525 = vunpack.c.l.b16 %v493
    %v526 = vunpack.c.l.b16 %v494
    %v527 = vunpack.c.l.b16 %v495
    %v528 = vunpack.c.l.b16 %v496
    %v529 = vunpack.c.l.b16 %v497
    %v530 = vunpack.c.l.b16 %v498
    %v531 = vunpack.c.l.b16 %v499
    %v532 = vunpack.c.l.b16 %v500
    %v533 = vunpack.c.l.b16 %v501
    %v534 = vunpack.c.l.b16 %v502
    %v535 = vunpack.c.l.b16 %v503
    %v536 = vunpack.c.l.b16 %v504
    %v537 = vunpack.c.l.b16 %v505
    %v538 = vunpack.c.l.b16 %v506
    %v539 = vpack.c.b16 %v524, %v523
    %v540 = vpack.c.b16 %v526, %v525
    %v541 = vpack.c.b16 %v528, %v527
    %v542 = vpack.c.b16 %v530, %v529
    %v543 = vpack.c.b16 %v532, %v531
    %v544 = vpack.c.b16 %v534, %v533
    %v545 = vpack.c.b16 %v536, %v535
    %v546 = vpack.c.b16 %v538, %v537
    %555 = vmatprep.subr.bf16.mxu0 0
    %556 = vmatpush1.bf16.msra.mxu0 %v546
    %557 = vmatprep.subr.bf16.mxu0 0
    %558 = vmatpush1.bf16.msra.mxu0 %v545
    %559 = vmatprep.subr.bf16.mxu0 0
    %560 = vmatpush1.bf16.msra.mxu0 %v544
    %561 = vmatprep.subr.bf16.mxu0 0
    %562 = vmatpush1.bf16.msra.mxu0 %v543
    %563 = vmatprep.subr.bf16.mxu0 0
    %564 = vmatpush1.bf16.msra.mxu0 %v542
    %565 = vmatprep.subr.bf16.mxu0 0
    %566 = vmatpush1.bf16.msra.mxu0 %v541
    %567 = vmatprep.subr.bf16.mxu0 0
    %568 = vmatpush1.bf16.msra.mxu0 %v540
    %569 = vmatprep.subr.bf16.mxu0 0
    %570 = vmatpush1.bf16.msra.mxu0 %v539
    %571 = vmatprep.subr.bf16.mxu0 0
    %572 = vmatpush2.bf16.msra.mxu0 0
    %573 = vmatprep.subr.bf16.mxu0 0
    %574 = vmatpush2.bf16.msra.mxu0 0
    %575 = vmatprep.subr.bf16.mxu0 0
    %576 = vmatpush2.bf16.msra.mxu0 0
    %577 = vmatprep.subr.bf16.mxu0 0
    %578 = vmatpush2.bf16.msra.mxu0 0
    %579 = vmatprep.subr.bf16.mxu0 0
    %580 = vmatpush2.bf16.msra.mxu0 0
    %581 = vmatprep.subr.bf16.mxu0 0
    %582 = vmatpush2.bf16.msra.mxu0 0
    %583 = vmatprep.subr.bf16.mxu0 0
    %584 = vmatpush2.bf16.msra.mxu0 0
    %585 = vmatprep.subr.bf16.mxu0 0
    %586 = vmatpush2.bf16.msra.mxu0 0
    %587 = vmatprep.mubr.bf16.mxu0 0
    %588 = vmatmul.mubr.bf16.gmra.mxu0 %v490
    %v589 = vpop.f32.mrf.mxu0
    %v590 = vadd.f32 0.0, %v589
    %v591 = vpop.f32.mrf.mxu0
    %v592 = vpop.f32.mrf.mxu0
    %v593 = vpop.f32.mrf.mxu0
    %594 = vdwg.mxu0
    %v595 = vlaneseq
    %v596 = vshrl.u32 %v595, 7
    %v597 = vsub.s32 5, %v596
    %v598 = vrot.slane %v28, %v597
    %v599 = vadd.f32 %v590, %v598
    %v600 = vmax.f32 %v599, 0.0
    %v601 = vlaneseq
    %v602 = vshrl.u32 %v601, 7
    %v603 = vsub.s32 7, %v602
    %v604 = vrot.slane %v28, %v603
    %606 = vrot.lane.b32.xlu0 %v604, 32
    %v607 = vpop.permute.xlu0 %606
    %v609 = vadd.f32 %v590, %v607
    %v610 = vpack.c.bf16 %v600, %v600
    %v611 = vld [vmem:[#allocation2 + $0x118] sm:$0xf]
    %v612 = vld [vmem:[#allocation2 + $0x11c] sm:$0xf]
    %v613 = vld [vmem:[#allocation2 + $0x120] sm:$0xf]
    %v614 = vld [vmem:[#allocation2 + $0x124] sm:$0xf]
    %v615 = vlaneseq
    %v616 = vshrl.u32 %v615, 7
    %v617 = vsub.s32 6, %v616
    %v618 = vrot.slane %v28, %v617
    %v623 = vunpack.c.l.b16 %v611
    %v624 = vunpack.c.l.b16 %v612
    %v625 = vunpack.c.l.b16 %v613
    %v626 = vunpack.c.l.b16 %v614
    %v627 = vpack.c.b16 %v624, %v623
    %v628 = vpack.c.b16 %v626, %v625
    %vm631 = vcmask 261120
    %v633 = vsel %vm631, %v610, 0
    %635 = vmatprep.subr.bf16.mxu0 0
    %636 = vmatpush1.bf16.msra.mxu0 0
    %637 = vmatprep.subr.bf16.mxu0 0
    %638 = vmatpush1.bf16.msra.mxu0 0
    %639 = vmatprep.subr.bf16.mxu0 0
    %640 = vmatpush1.bf16.msra.mxu0 0
    %641 = vmatprep.subr.bf16.mxu0 0
    %642 = vmatpush1.bf16.msra.mxu0 0
    %643 = vmatprep.subr.bf16.mxu0 0
    %644 = vmatpush1.bf16.msra.mxu0 0
    %645 = vmatprep.subr.bf16.mxu0 0
    %646 = vmatpush1.bf16.msra.mxu0 0
    %647 = vmatprep.subr.bf16.mxu0 0
    %648 = vmatpush1.bf16.msra.mxu0 %v628
    %649 = vmatprep.subr.bf16.mxu0 0
    %650 = vmatpush1.bf16.msra.mxu0 %v627
    %651 = vmatprep.subr.bf16.mxu0 0
    %652 = vmatpush2.bf16.msra.mxu0 0
    %653 = vmatprep.subr.bf16.mxu0 0
    %654 = vmatpush2.bf16.msra.mxu0 0
    %655 = vmatprep.subr.bf16.mxu0 0
    %656 = vmatpush2.bf16.msra.mxu0 0
    %657 = vmatprep.subr.bf16.mxu0 0
    %658 = vmatpush2.bf16.msra.mxu0 0
    %659 = vmatprep.subr.bf16.mxu0 0
    %660 = vmatpush2.bf16.msra.mxu0 0
    %661 = vmatprep.subr.bf16.mxu0 0
    %662 = vmatpush2.bf16.msra.mxu0 0
    %663 = vmatprep.subr.bf16.mxu0 0
    %664 = vmatpush2.bf16.msra.mxu0 0
    %665 = vmatprep.subr.bf16.mxu0 0
    %666 = vmatpush2.bf16.msra.mxu0 0
    %667 = vmatprep.mubr.bf16.mxu0 0
    %668 = vmatmul.mubr.bf16.gmra.mxu0 %v633
    %v669 = vpop.f32.mrf.mxu0
    %v670 = vadd.f32 %v618, %v669
    %v671 = vpop.f32.mrf.mxu0
    %v672 = vpop.f32.mrf.mxu0
    %v673 = vpop.f32.mrf.mxu0
    %674 = vdwg.mxu0
    %v675 = vmax.f32 %v670, 0.0
    %677 = vrot.lane.b32.xlu0 %v609, 96
    %v678 = vpop.permute.xlu0 %677
    %v680 = vadd.f32 %v675, %v678
    %v681 = vmax.f32 %v680, 0.0
    %v682 = vld [vmem:[#allocation2 + $0x128] sm:$0xf]
    %v683 = vld [vmem:[#allocation2 + $0x12c] sm:$0xf]
    %v684 = vld [vmem:[#allocation2 + $0x130] sm:$0xf]
    %v685 = vld [vmem:[#allocation2 + $0x134] sm:$0xf]
    %v686 = vld [vmem:[#allocation2 + $0x138] sm:$0xf]
    %v692 = vunpack.c.l.b16 %v682
    %v693 = vunpack.c.l.b16 %v683
    %v694 = vunpack.c.l.b16 %v684
    %v695 = vunpack.c.l.b16 %v685
    %v696 = vunpack.c.l.b16 %v686
    %v697 = vpack.c.b16 %v693, %v692
    %v698 = vpack.c.b16 %v695, %v694
    %v699 = vpack.c.b16 %v696, %v696
    %vm702 = vcmask 326656
    %v703 = vsel %vm702, %v31, 0
    %v706 = vsel %vm52, %v699, 0
    %708 = vmatprep.subr.bf16.mxu0 0
    %709 = vmatpush1.bf16.msra.mxu0 0
    %710 = vmatprep.subr.bf16.mxu0 0
    %711 = vmatpush1.bf16.msra.mxu0 0
    %712 = vmatprep.subr.bf16.mxu0 0
    %713 = vmatpush1.bf16.msra.mxu0 0
    %714 = vmatprep.subr.bf16.mxu0 0
    %715 = vmatpush1.bf16.msra.mxu0 0
    %716 = vmatprep.subr.bf16.mxu0 0
    %717 = vmatpush1.bf16.msra.mxu0 0
    %718 = vmatprep.subr.bf16.mxu0 0
    %719 = vmatpush1.bf16.msra.mxu0 %v706
    %720 = vmatprep.subr.bf16.mxu0 0
    %721 = vmatpush1.bf16.msra.mxu0 %v698
    %722 = vmatprep.subr.bf16.mxu0 0
    %723 = vmatpush1.bf16.msra.mxu0 %v697
    %724 = vmatprep.subr.bf16.mxu0 0
    %725 = vmatpush2.bf16.msra.mxu0 0
    %726 = vmatprep.subr.bf16.mxu0 0
    %727 = vmatpush2.bf16.msra.mxu0 0
    %728 = vmatprep.subr.bf16.mxu0 0
    %729 = vmatpush2.bf16.msra.mxu0 0
    %730 = vmatprep.subr.bf16.mxu0 0
    %731 = vmatpush2.bf16.msra.mxu0 0
    %732 = vmatprep.subr.bf16.mxu0 0
    %733 = vmatpush2.bf16.msra.mxu0 0
    %734 = vmatprep.subr.bf16.mxu0 0
    %735 = vmatpush2.bf16.msra.mxu0 0
    %736 = vmatprep.subr.bf16.mxu0 0
    %737 = vmatpush2.bf16.msra.mxu0 0
    %738 = vmatprep.subr.bf16.mxu0 0
    %739 = vmatpush2.bf16.msra.mxu0 0
    %740 = vmatprep.mubr.bf16.mxu0 0
    %741 = vmatmul.mubr.bf16.gmra.mxu0 %v703
    %v742 = vpop.f32.mrf.mxu0
    %v743 = vadd.f32 0.0, %v742
    %v744 = vpop.f32.mrf.mxu0
    %v745 = vpop.f32.mrf.mxu0
    %v746 = vpop.f32.mrf.mxu0
    %747 = vdwg.mxu0
    %v748 = vlaneseq
    %v749 = vshrl.u32 %v748, 7
    %v750 = vsub.s32 0, %v749
    %v751 = vrot.slane %v29, %v750
    %v752 = vadd.f32 %v743, %v751
    %v753 = vmax.f32 %v752, 0.0
    %755 = vrot.lane.b32.xlu0 %v753, 32
    %v756 = vpop.permute.xlu0 %755
    %v758 = vsel %vm631, %v681, %v756
    %v759 = vpack.c.bf16 %v758, %v758
    %v760 = vld [vmem:[#allocation2 + $0x13c] sm:$0xf]
    %v761 = vld [vmem:[#allocation2 + $0x140] sm:$0xf]
    %v762 = vld [vmem:[#allocation2 + $0x144] sm:$0xf]
    %v763 = vld [vmem:[#allocation2 + $0x148] sm:$0xf]
    %v764 = vld [vmem:[#allocation2 + $0x14c] sm:$0x3]
    %v770 = vunpack.c.l.b16 %v760
    %v771 = vunpack.c.l.b16 %v761
    %v772 = vunpack.c.l.b16 %v762
    %v773 = vunpack.c.l.b16 %v763
    %v774 = vunpack.c.l.b16 %v764
    %v775 = vpack.c.b16 %v771, %v770
    %v776 = vpack.c.b16 %v773, %v772
    %v777 = vpack.c.b16 %v774, %v774
    %781 = vrot.lane.b32.xlu0 %v743, 124
    %v782 = vpop.permute.xlu0 %781
    %vm784 = vcmask 293888
    %v786 = vsel %vm784, %v759, 0
    %vm788 = vcmask 1041408
    %v790 = vsel %vm788, %v777, 0
    %792 = vmatprep.subr.bf16.mxu0 0
    %793 = vmatpush1.bf16.msra.mxu0 0
    %794 = vmatprep.subr.bf16.mxu0 0
    %795 = vmatpush1.bf16.msra.mxu0 0
    %796 = vmatprep.subr.bf16.mxu0 0
    %797 = vmatpush1.bf16.msra.mxu0 0
    %798 = vmatprep.subr.bf16.mxu0 0
    %799 = vmatpush1.bf16.msra.mxu0 0
    %800 = vmatprep.subr.bf16.mxu0 0
    %801 = vmatpush1.bf16.msra.mxu0 0
    %802 = vmatprep.subr.bf16.mxu0 0
    %803 = vmatpush1.bf16.msra.mxu0 %v790
    %804 = vmatprep.subr.bf16.mxu0 0
    %805 = vmatpush1.bf16.msra.mxu0 %v776
    %806 = vmatprep.subr.bf16.mxu0 0
    %807 = vmatpush1.bf16.msra.mxu0 %v775
    %808 = vmatprep.subr.bf16.mxu0 0
    %809 = vmatpush2.bf16.msra.mxu0 0
    %810 = vmatprep.subr.bf16.mxu0 0
    %811 = vmatpush2.bf16.msra.mxu0 0
    %812 = vmatprep.subr.bf16.mxu0 0
    %813 = vmatpush2.bf16.msra.mxu0 0
    %814 = vmatprep.subr.bf16.mxu0 0
    %815 = vmatpush2.bf16.msra.mxu0 0
    %816 = vmatprep.subr.bf16.mxu0 0
    %817 = vmatpush2.bf16.msra.mxu0 0
    %818 = vmatprep.subr.bf16.mxu0 0
    %819 = vmatpush2.bf16.msra.mxu0 0
    %820 = vmatprep.subr.bf16.mxu0 0
    %821 = vmatpush2.bf16.msra.mxu0 0
    %822 = vmatprep.subr.bf16.mxu0 0
    %823 = vmatpush2.bf16.msra.mxu0 0
    %824 = vmatprep.mubr.bf16.mxu0 0
    %825 = vmatmul.mubr.bf16.gmra.mxu0 %v786
    %v826 = vpop.f32.mrf.mxu0
    %v827 = vadd.f32 %v782, %v826
    %v828 = vpop.f32.mrf.mxu0
    %v829 = vpop.f32.mrf.mxu0
    %v830 = vpop.f32.mrf.mxu0
    %831 = vdwg.mxu0
    %v832 = vlaneseq
    %v833 = vshrl.u32 %v832, 7
    %v834 = vsub.s32 1, %v833
    %v835 = vrot.slane %v29, %v834
    %v836 = vadd.f32 %v827, %v835
    %vm837 = vcmask 97280
    %838 = vst.msk [vmem:[%s2] sm:$0xff] %vm837, %v836
    // Predicated region
    $region14: #{_forward_core.1} parent=1 // pred_check
      _
    $region15: #{_forward_core.1} parent=1 // pred_check_branch
      %840 = sbr.rel (0) target = $region17
    $region16: #{_forward_core.1} parent=1 // pred_region
      _
    $region17: #{_forward_core.1} parent=1 // pred_fallthru
      _
    // Predicated region
    $region18: #{_forward_core.1} parent=1 // pred_check
      _
    $region19: #{_forward_core.1} parent=1 // pred_check_branch
      %842 = sbr.rel (0) target = $region21
    $region20: #{_forward_core.1} parent=1 // pred_region
      _
    $region21: #{_forward_core.1} parent=1 // pred_fallthru
      _
    %843 = vsyncpa [#allocation3], 1

</llo_original>
